<compile_context>
chip_gen: v7x
topology: tpu7x:2x2x1
jax: 0.10.0
libtpu: 0.0.40
codegen_flags: <defaults>
</compile_context>

<pallas_src>
import numpy as np
import jax
import jax.numpy as jnp
from jax import lax
from jax.experimental import pallas as pl
from jax.experimental.pallas import tpu as pltpu


# ----------------------------------------------------------------------------- projection glue

def _fold_transform(intrinsic, extrinsic):
    """Fold K^-1 and the extrinsic into one 2x3 affine map [px, py, 1] -> (world_x, world_y)."""
    if intrinsic.ndim == 3:
        # TODO(synk): the reference torch forward is only well-formed for shared (unbatched)
        # intrinsic/extrinsic (its `cat` along dim=0 assumes (3, HW) coords); we use matrix 0.
        intrinsic = intrinsic[0]
    if extrinsic.ndim == 3:
        extrinsic = extrinsic[0]
    k_inv = jnp.linalg.inv(intrinsic.astype(jnp.float32))      # 3x3 inverse: cheap XLA glue
    m = extrinsic[:2, :3].astype(jnp.float32) @ k_inv          # (2, 3)
    return jnp.stack([
        m[0, 0], m[0, 1], m[0, 2] + extrinsic[0, 3],
        m[1, 0], m[1, 1], m[1, 2] + extrinsic[1, 3],
    ]).astype(jnp.float32)                                     # (6,)


def _pixel_bev_indices(a, img_h, img_w, bev_h, bev_w, pixel_size):
    """Per-pixel flattened BEV cell index (-1 if out of bounds) and validity mask."""
    hw = img_h * img_w
    pix = jnp.arange(hw, dtype=jnp.int32)
    px = (pix % img_w).astype(jnp.float32)
    py = (pix // img_w).astype(jnp.float32)
    wx = a[0] * px + a[1] * py + a[2]
    wy = a[3] * px + a[4] * py + a[5]
    bx = (wx / pixel_size).astype(jnp.int32) + bev_w // 2       # trunc-toward-zero == torch .long()
    by = (wy / pixel_size).astype(jnp.int32) + bev_h // 2
    valid = (bx >= 0) & (bx < bev_w) & (by >= 0) & (by < bev_h)
    flat = jnp.where(valid, by * bev_w + bx, -1)
    return flat, valid


# ----------------------------------------------------------------------------- kernel

def _bev_kernel(counts_ref, cids_ref, flat_ref, feat_ref, bev_in_ref, out_ref, acc_ref):
    # counts_ref : SMEM (nj,)        number of occupied pixel chunks per BEV tile
    # cids_ref   : SMEM (nj*nk,)     compacted chunk list (only used by index_maps)
    # flat_ref   : VMEM (1, tk)      flat BEV cell index per pixel of the current chunk
    # feat_ref   : VMEM (bc, tk)     bf16 feature chunk
    # bev_in_ref : VMEM (bc, tj)     existing BEV tile (f32)
    # out_ref    : VMEM (bc, tj)     updated BEV tile (f32)
    # acc_ref    : VMEM (bc, tj)     f32 accumulator scratch
    del cids_ref
    j = pl.program_id(0)
    k = pl.program_id(1)
    nk = pl.num_programs(1)
    tj = out_ref.shape[1]
    tk = flat_ref.shape[1]

    @pl.when(k == 0)
    def _():
        # Fold the existing BEV tile into the accumulator (accumulate-into-existing).
        acc_ref[...] = bev_in_ref[...]

    @pl.when(k < counts_ref[j])          # only the occupied, compacted chunks do any work
    def _():
        # Transposed one-hot scatter matrix for this (BEV-tile, pixel-chunk) pair: (tj, tk).
        # Invalid pixels carry flat == -1 and never match a non-negative cell id.
        rows = j * tj + lax.broadcasted_iota(jnp.int32, (tj, tk), 0)
        onehot_t = (flat_ref[...] == rows).astype(jnp.bfloat16)
        # Scatter-add as an MXU matmul (A @ B^T pattern): (bc, tk) x (tj, tk) -> (bc, tj).
        acc_ref[...] += jnp.einsum('ck,jk->cj', feat_ref[...], onehot_t,
                                   preferred_element_type=jnp.float32)

    @pl.when(k == nk - 1)
    def _():
        out_ref[...] = acc_ref[...]


# ----------------------------------------------------------------------------- wrapper

def _pick_tile(total, candidates):
    divs = [c for c in candidates if total % c == 0]
    multi = [c for c in divs if total // c >= 2]      # keep >=2 tiles (pipeline / 2-TC balance)
    if multi:
        return multi[0]
    if divs:
        return divs[0]
    return total


def _vmem_capacity_bytes():
    try:
        info = pltpu.get_tpu_info()
        cap = getattr(info, "vmem_capacity_bytes", None)
        if cap:
            return int(cap)
    except Exception:
        pass
    return 128 * 2 ** 20


def bev_projector_forward(feature_map, intrinsic, extrinsic, bev_feature_map,
                          bev_size=(256, 128), pixel_size=0.5):
    b, c, h, w = feature_map.shape
    bev_h, bev_w = bev_size
    assert bev_feature_map.shape == (b, c, bev_h, bev_w)
    hw = h * w
    nb = bev_h * bev_w
    assert nb % 128 == 0, "flattened BEV size must be a multiple of 128"
    bc = b * c

    cap = _vmem_capacity_bytes()
    small_vmem = cap <= 64 * 2 ** 20                        # v7x-class parts (64 MiB VMEM)
    tj_cands = (512, 256, 128) if small_vmem else (1024, 512, 256, 128)
    tk_cands = (1024, 512, 256, 128) if small_vmem else (2048, 1024, 512, 256, 128)
    tj = _pick_tile(nb, tj_cands)                           # BEV tile (lane-dense output axis)
    tk = _pick_tile(hw, tk_cands)                           # pixel / reduction tile
    nj, nk = nb // tj, hw // tk

    # Hoisted projection: one flat BEV index per pixel, computed once outside the kernel.
    a = _fold_transform(intrinsic, extrinsic)
    flat, valid = _pixel_bev_indices(a, h, w, bev_h, bev_w, pixel_size)

    # Per-tile compacted list of occupied pixel chunks (block-sparse schedule, scalar prefetch).
    pix_chunk = jnp.arange(hw, dtype=jnp.int32) // tk
    pix_tile = jnp.where(valid, flat // tj, 0)
    occ = jnp.zeros((nj, nk), jnp.int32).at[pix_tile, pix_chunk].max(valid.astype(jnp.int32))
    counts = occ.sum(axis=1).astype(jnp.int32)                       # (nj,)
    order = jnp.argsort(-occ, axis=1).astype(jnp.int32)              # occupied chunks first (stable)
    sel = jnp.minimum(jnp.arange(nk, dtype=jnp.int32)[None, :],
                      jnp.maximum(counts - 1, 0)[:, None])           # clamp tail -> repeat last chunk
    chunk_ids = jnp.take_along_axis(order, sel, axis=1).reshape(nj * nk).astype(jnp.int32)

    flat_row = flat.reshape(1, hw)                                   # lane-dense flat-index layout
    feat2d = feature_map.reshape(bc, hw).astype(jnp.bfloat16)        # bf16 MXU operand
    bev2d = bev_feature_map.reshape(bc, nb).astype(jnp.float32)

    # Explicit VMEM budget from actual buffer sizes with margin, capped below physical capacity.
    bc_p = ((bc + 7) // 8) * 8
    est = (2 * bc_p * tk * 2          # bf16 feature chunk (double-buffered)
           + 2 * 8 * tk * 4           # flat-index (1, tk) blocks, sublane-padded, double-buffered
           + 4 * bc_p * tj * 4        # bev_in + out tiles (double-buffered, f32)
           + bc_p * tj * 4            # f32 accumulator scratch
           + 2 * tj * tk * 2)         # bf16 one-hot + matmul staging
    headroom = 16 * 2 ** 20
    vmem_limit = max(min(cap - headroom, max(32 * 2 ** 20, 2 * est)), 2 * est)
    vmem_limit = int(min(vmem_limit, cap))

    # Advisory cost hint (assumes each occupied pixel chunk touches ~one BEV tile).
    cost = pl.CostEstimate(
        flops=int(2 * bc * hw * tj),
        transcendentals=0,
        bytes_accessed=int(bc * hw * 2 + 2 * bc * nb * 4 + hw * 4 + (nj + nj * nk) * 4))

    def _pix_map(j, k, counts_ref, cids_ref):       # occupied chunk for this (tile, step)
        return (0, cids_ref[j * nk + k])

    def _bev_map(j, k, counts_ref, cids_ref):       # resident BEV tile across the k loop
        return (0, j)

    grid_spec = pltpu.PrefetchScalarGridSpec(
        num_scalar_prefetch=2,
        grid=(nj, nk),
        in_specs=[
            pl.BlockSpec((1, tk), _pix_map),        # per-pixel flat BEV index (lane dense)
            pl.BlockSpec((bc, tk), _pix_map),       # bf16 feature chunk (streams, DMA elided on repeats)
            pl.BlockSpec((bc, tj), _bev_map),       # existing BEV tile
        ],
        out_specs=pl.BlockSpec((bc, tj), _bev_map),
        scratch_shapes=[pltpu.VMEM((bc, tj), jnp.float32)],
    )

    out2d = pl.pallas_call(
        _bev_kernel,
        out_shape=jax.ShapeDtypeStruct((bc, nb), jnp.float32),
        grid_spec=grid_spec,
        # Operand index counts the scalar-prefetch args: (counts, chunk_ids, flat, feat, bev) -> 4.
        input_output_aliases={4: 0},
        compiler_params=pltpu.CompilerParams(
            dimension_semantics=("parallel", "arbitrary"),
            vmem_limit_bytes=vmem_limit),
        cost_estimate=cost,
    )(counts, chunk_ids, flat_row, feat2d, bev2d)
    return out2d.reshape(b, c, bev_h, bev_w)


# ----------------------------------------------------------------------------- pure-JAX reference

def bev_projector_reference(feature_map, intrinsic, extrinsic, bev_feature_map,
                            bev_size=(256, 128), pixel_size=0.5):
    """Pure-JAX reference mirroring the torch scatter semantics (f32 throughout)."""
    b, c, h, w = feature_map.shape
    bev_h, bev_w = bev_size
    hw = h * w
    nb = bev_h * bev_w
    a = _fold_transform(intrinsic, extrinsic)
    pix = jnp.arange(hw, dtype=jnp.int32)
    px = (pix % w).astype(jnp.float32)
    py = (pix // w).astype(jnp.float32)
    wx = a[0] * px + a[1] * py + a[2]
    wy = a[3] * px + a[4] * py + a[5]
    bx = (wx / pixel_size).astype(jnp.int32) + bev_w // 2
    by = (wy / pixel_size).astype(jnp.int32) + bev_h // 2
    valid = (bx >= 0) & (bx < bev_w) & (by >= 0) & (by < bev_h)
    flat = jnp.where(valid, by * bev_w + bx, nb)                 # invalid -> dump slot
    feat2d = feature_map.reshape(b * c, hw).astype(jnp.float32)
    scat = jnp.zeros((b * c, nb + 1), jnp.float32).at[:, flat].add(feat2d)
    bev2d = bev_feature_map.reshape(b * c, nb).astype(jnp.float32) + scat[:, :nb]
    return bev2d.reshape(b, c, bev_h, bev_w)


if __name__ == "__main__":
    key = jax.random.PRNGKey(0)
    k_feat, k_bev = jax.random.split(key)

    B, C, H, W = 2, 4, 16, 16
    BEV_SIZE = (32, 32)
    PIXEL_SIZE = 0.5

    # Quantize the feature map to bf16-representable values so the kernel's bf16 MXU path is
    # exact against the f32 reference up to summation order (the kernel itself accepts
    # bf16-level feature error for arbitrary f32 inputs).
    feature_map = jax.random.normal(k_feat, (B, C, H, W), dtype=jnp.float32)
    feature_map = feature_map.astype(jnp.bfloat16).astype(jnp.float32)
    bev_feature_map = jax.random.normal(k_bev, (B, C) + BEV_SIZE, dtype=jnp.float32)

    # Deterministic pinhole intrinsics and a 3-4-5 yaw rotation + translation extrinsic,
    # chosen so some pixels project inside the BEV grid and some fall out of bounds.
    intrinsic = jnp.tile(jnp.array([[2.0, 0.0, 7.5],
                                    [0.0, 2.0, 7.5],
                                    [0.0, 0.0, 1.0]], dtype=jnp.float32), (B, 1, 1))
    extrinsic = jnp.tile(jnp.array([[0.6, -0.8, 0.0, 3.0],
                                    [0.8, 0.6, 0.0, -6.5],
                                    [0.0, 0.0, 1.0, 0.0],
                                    [0.0, 0.0, 0.0, 1.0]], dtype=jnp.float32), (B, 1, 1))

    # Compute the reference first so the aliased in-place kernel output cannot interfere.
    ref = bev_projector_reference(feature_map, intrinsic, extrinsic, bev_feature_map,
                                  bev_size=BEV_SIZE, pixel_size=PIXEL_SIZE)
    ref = jax.block_until_ready(ref)

    out = bev_projector_forward(feature_map, intrinsic, extrinsic, bev_feature_map,
                                bev_size=BEV_SIZE, pixel_size=PIXEL_SIZE)
    out = jax.block_until_ready(out)

    np.testing.assert_allclose(np.asarray(out), np.asarray(ref), rtol=1e-3, atol=1e-3)
    print("KERNEL_OK")
</pallas_src>

<mosaic_0001>
module attributes {stable_mosaic.version = 11 : i64} {
  func.func @_bev_kernel(%arg0: i32, %arg1: i32, %arg2: memref<2xi32, #tpu.memory_space<smem>>, %arg3: memref<4xi32, #tpu.memory_space<smem>>, %arg4: memref<1x128xi32, #tpu.memory_space<vmem>>, %arg5: memref<8x128xbf16, #tpu.memory_space<vmem>>, %arg6: memref<8x512xf32, #tpu.memory_space<vmem>>, %arg7: memref<8x512xf32, #tpu.memory_space<vmem>>, %arg8: memref<8x512xf32, #tpu.memory_space<vmem>>) attributes {dimension_semantics = [#tpu.dimension_semantics<parallel>, #tpu.dimension_semantics<arbitrary>], iteration_bounds = array<i64: 2, 2>, scalar_prefetch = 2 : i64, scratch_operands = 1 : i64, tpu.core_type = #tpu.core_type<tc>, window_params = [{transform_indices = @transform_0, window_bounds = array<i64: 1, 128>}, {transform_indices = @transform_1, window_bounds = array<i64: 8, 128>}, {transform_indices = @transform_2, window_bounds = array<i64: 8, 512>}, {transform_indices = @transform_3, window_bounds = array<i64: 8, 512>}]} {
    %c0_i32 = arith.constant 0 : i32
    %0 = arith.cmpi eq, %arg1, %c0_i32 : i32
    %1 = arith.extui %0 : i1 to i32
    %c0_i32_0 = arith.constant 0 : i32
    %2 = arith.cmpi ne, %1, %c0_i32_0 : i32
    scf.if %2 {
      %c0 = arith.constant 0 : index
      %c0_3 = arith.constant 0 : index
      %11 = vector.load %arg6[%c0, %c0_3] : memref<8x512xf32, #tpu.memory_space<vmem>>, vector<8x512xf32>
      %c0_4 = arith.constant 0 : index
      %c0_5 = arith.constant 0 : index
      %12 = vector.load %arg8[%c0_4, %c0_5] : memref<8x512xf32, #tpu.memory_space<vmem>>, vector<8x512xf32>
      tpu.vector_store %arg8[%c0_4, %c0_5], %11 {strides = array<i32>} : memref<8x512xf32, #tpu.memory_space<vmem>>, vector<8x512xf32>,
    } else {
    }
    %3 = arith.index_cast %arg0 : i32 to index
    %4 = memref.load %arg2[%3] : memref<2xi32, #tpu.memory_space<smem>>
    %5 = arith.cmpi slt, %arg1, %4 : i32
    %6 = arith.extui %5 : i1 to i32
    %c0_i32_1 = arith.constant 0 : i32
    %7 = arith.cmpi ne, %6, %c0_i32_1 : i32
    scf.if %7 {
      %c512_i32 = arith.constant 512 : i32
      %11 = arith.muli %arg0, %c512_i32 : i32
      %12 = tpu.iota {dimensions = array<i32: 0>} : vector<512x128xi32>
      %13 = vector.broadcast %11 : i32 to vector<512x128xi32>
      %14 = arith.addi %13, %12 : vector<512x128xi32>
      %c0 = arith.constant 0 : index
      %c0_3 = arith.constant 0 : index
      %15 = vector.load %arg4[%c0, %c0_3] : memref<1x128xi32, #tpu.memory_space<vmem>>, vector<1x128xi32>
      %16 = vector.broadcast %15 : vector<1x128xi32> to vector<512x128xi32>
      %17 = arith.cmpi eq, %16, %14 : vector<512x128xi32>
      %18 = arith.extui %17 : vector<512x128xi1> to vector<512x128xi32>
      %19 = arith.sitofp %18 : vector<512x128xi32> to vector<512x128xf32>
      %20 = arith.truncf %19 : vector<512x128xf32> to vector<512x128xbf16>
      %c0_4 = arith.constant 0 : index
      %c0_5 = arith.constant 0 : index
      %21 = vector.load %arg8[%c0_4, %c0_5] : memref<8x512xf32, #tpu.memory_space<vmem>>, vector<8x512xf32>
      %c0_6 = arith.constant 0 : index
      %c0_7 = arith.constant 0 : index
      %22 = vector.load %arg5[%c0_6, %c0_7] : memref<8x128xbf16, #tpu.memory_space<vmem>>, vector<8x128xbf16>
      "tpu.trace_start"() <{level = 10 : i32, message = "ck,jk->cj"}> : () -> ()
      %cst = arith.constant dense<0.000000e+00> : vector<8x512xf32>
      %23 = tpu.matmul %22, %20, %cst {dimension_numbers = #tpu.dot_dimension_numbers<[1], [1], [0], [0], [0, 0, 1, 0], [], []>} : vector<8x128xbf16>, vector<512x128xbf16>, vector<8x512xf32> -> vector<8x512xf32>
      "tpu.trace_stop"() : () -> ()
      %24 = arith.addf %21, %23 : vector<8x512xf32>
      %c0_8 = arith.constant 0 : index
      %c0_9 = arith.constant 0 : index
      %25 = vector.load %arg8[%c0_8, %c0_9] : memref<8x512xf32, #tpu.memory_space<vmem>>, vector<8x512xf32>
      tpu.vector_store %arg8[%c0_8, %c0_9], %24 {strides = array<i32>} : memref<8x512xf32, #tpu.memory_space<vmem>>, vector<8x512xf32>,
    } else {
    }
    %c1_i32 = arith.constant 1 : i32
    %8 = arith.cmpi eq, %arg1, %c1_i32 : i32
    %9 = arith.extui %8 : i1 to i32
    %c0_i32_2 = arith.constant 0 : i32
    %10 = arith.cmpi ne, %9, %c0_i32_2 : i32
    scf.if %10 {
      %c0 = arith.constant 0 : index
      %c0_3 = arith.constant 0 : index
      %11 = vector.load %arg8[%c0, %c0_3] : memref<8x512xf32, #tpu.memory_space<vmem>>, vector<8x512xf32>
      %c0_4 = arith.constant 0 : index
      %c0_5 = arith.constant 0 : index
      %12 = vector.load %arg7[%c0_4, %c0_5] : memref<8x512xf32, #tpu.memory_space<vmem>>, vector<8x512xf32>
      tpu.vector_store %arg7[%c0_4, %c0_5], %11 {strides = array<i32>} : memref<8x512xf32, #tpu.memory_space<vmem>>, vector<8x512xf32>,
    } else {
    }
    return
  }
  func.func @transform_0(%arg0: i32, %arg1: i32, %arg2: memref<2xi32, #tpu.memory_space<smem>>, %arg3: memref<4xi32, #tpu.memory_space<smem>>) -> (i32, i32) {
    %c2_i32 = arith.constant 2 : i32
    %0 = arith.muli %arg0, %c2_i32 : i32
    %1 = arith.addi %0, %arg1 : i32
    %2 = arith.index_cast %1 : i32 to index
    %3 = memref.load %arg3[%2] : memref<4xi32, #tpu.memory_space<smem>>
    %c0_i32 = arith.constant 0 : i32
    %c0_i32_0 = arith.constant 0 : i32
    return %c0_i32, %3 : i32, i32
  }
  func.func @transform_1(%arg0: i32, %arg1: i32, %arg2: memref<2xi32, #tpu.memory_space<smem>>, %arg3: memref<4xi32, #tpu.memory_space<smem>>) -> (i32, i32) {
    %c2_i32 = arith.constant 2 : i32
    %0 = arith.muli %arg0, %c2_i32 : i32
    %1 = arith.addi %0, %arg1 : i32
    %2 = arith.index_cast %1 : i32 to index
    %3 = memref.load %arg3[%2] : memref<4xi32, #tpu.memory_space<smem>>
    %c0_i32 = arith.constant 0 : i32
    %c0_i32_0 = arith.constant 0 : i32
    return %c0_i32, %3 : i32, i32
  }
  func.func @transform_2(%arg0: i32, %arg1: i32, %arg2: memref<2xi32, #tpu.memory_space<smem>>, %arg3: memref<4xi32, #tpu.memory_space<smem>>) -> (i32, i32) {
    %c0_i32 = arith.constant 0 : i32
    %c0_i32_0 = arith.constant 0 : i32
    return %c0_i32, %arg0 : i32, i32
  }
  func.func @transform_3(%arg0: i32, %arg1: i32, %arg2: memref<2xi32, #tpu.memory_space<smem>>, %arg3: memref<4xi32, #tpu.memory_space<smem>>) -> (i32, i32) {
    %c0_i32 = arith.constant 0 : i32
    %c0_i32_0 = arith.constant 0 : i32
    return %c0_i32, %arg0 : i32, i32
  }
}

</mosaic_0001>

<llo_original>
// kernel: tpu_custom_call.1
$region0: #{tpu_custom_call.1}
  #allocation0 [shape = 'u32[]', space=smem, size = 0x4, offset = 0x4, fixed_abs, tag = 'smem constant byte address 0x4 - core index']
  #allocation1 [shape = 'u32[144,128]{1,0:T(1,128)}', space=vmem, size = 0x12000, scoped, tag = 'internal scratch']
  #allocation2 [shape = 'f32[8,512]{1,0:T(8,128)}', space=vmem, size = 0x4000, scoped, tag = 'scratch operand']
  #allocation3 [shape = 's32[1]{0}', space=sflag, size = 0x4, scoped, tag = 'scoped memory for tpu_custom_call.1']
  #allocation4 [shape = 'u8[512]{0}', space=smem, size = 0x200, scoped, tag = 'prefetched SMEM operand 0']
  #allocation5 [shape = 'u8[512]{0}', space=smem, size = 0x200, scoped, tag = 'prefetched SMEM operand 1']
  %s0 = inlined_call_operand.vmem [shape: s32[2], index: 0, kind: input, shape index: {}]
  %s1 = inlined_call_operand.vmem [shape: s32[4], index: 1, kind: input, shape index: {}]
  %s2 = inlined_call_operand.vmem [shape: s32[1,256], index: 2, kind: input, shape index: {}]
  %s3 = inlined_call_operand.vmem [shape: bf16[8,256], index: 3, kind: input, shape index: {}]
  %s4 = inlined_call_operand.hbm [shape: f32[8,1024], index: 4, kind: input, shape index: {}, may-alias: {4,5}]
  %s5 = inlined_call_operand.hbm [shape: f32[8,1024], index: 5, kind: output, shape index: {}, may-alias: {4,5}]
  %s6 = sld [smem:[#allocation0]]
  $region61: #{tpu_custom_call.1} parent=0
    _
  %s8 = ssub.s32 1, %s6
  %s9 = scalar_select 0, %s8, %s6
  %s10 = sshll.u32 %s0, 4
  %s11 = int_to_ptr.vmem [resolvable:$true] %s10
  %13 = dma.vmem_to_smem %s11, 16, [#allocation4], [#allocation3]
  %s14 = sshll.u32 %s1, 4
  %s15 = int_to_ptr.vmem [resolvable:$true] %s14
  %17 = dma.vmem_to_smem %s15, 16, [#allocation5], [#allocation3]
  %18 = dma.done [#allocation3], 32
  %19 = sfence
  $region1: #{tpu_custom_call.1} parent=0
    #allocation6 [shape = 'u8[32768]{0}', space=vmem, size = 0x8000, scoped, tag = 'input window, operand 4']
    #allocation7 [shape = 's32[2]{0}', space=sflag, size = 0x8, scoped, tag = 'scoped memory for tpu_custom_call.1']
    #allocation8 [shape = 's32[2]{0}', space=sflag, size = 0x8, scoped, tag = 'scoped memory for tpu_custom_call.1']
    #allocation9 [shape = 'u8[32768]{0}', space=vmem, size = 0x8000, scoped, tag = 'output window, operand 0']
    %20 = vsyncpa [#allocation7], 0
    %s21 = scalar_lea.sflag [#allocation7], 1
    %22 = vsyncpa %s21, 0
    %23 = vsyncpa [#allocation8], 0
    %s24 = scalar_lea.sflag [#allocation8], 1
    %25 = vsyncpa %s24, 0
    loop: start=0, step=1, limit=6
    $region2: #{tpu_custom_call.1} parent=1 // loop_pre_header
      _
    $region3: #{tpu_custom_call.1} parent=1 // loop_header
      %s27 = sphi 0, %s31
      %p28 = scmp.ge.s32.totalorder %s27, 6
      %s34 = sphi 0, %s46
      %s35 = sphi 0, %s42
      %s36 = sphi 0, %s34
      %s37 = sphi 0, %s35
      %s38 = sphi 0, %s36
      %s39 = sphi 0, %s37
      %s55 = sphi 0, %s57
      %s58 = sphi 0, %s55
      %s59 = sphi 0, %s58
      %s75 = sphi 0, %s59
      %s87 = sphi 0, %s89
      %s90 = sphi 0, %s87
      %s91 = sphi 0, %s90
      %s107 = sphi 0, %s91
      %s113 = sphi 0, %s115
      %s116 = sphi 0, %s113
      %s117 = sphi 0, %s116
      %s133 = sphi 0, %s117
      %s139 = sphi 0, %s141
      %s142 = sphi 0, %s139
      %s143 = sphi 0, %s142
      %s159 = sphi 0, %s143
    $region4: #{tpu_custom_call.1} parent=1 // loop_header_branch
      %30 = sbr.rel (%p28) target = $region8
    $region5: #{tpu_custom_call.1} parent=1 // loop_body
      %s32 = ssub.s32 %s27, 1
      %s33 = ssub.s32 %s27, 2
      %s40 = sadd.s32 1, %s35
      %p41 = scmp.ge.s32.totalorder %s40, 2
      %s42 = scalar_select %p41, 0, %s40
      %s43 = sadd.s32 1, %s34
      %s44 = scalar_select %p41, %s43, %s34
      %p45 = scmp.ge.s32.totalorder %s44, 2
      %s46 = scalar_select %p45, 0, %s44
      %s47 = smul.u32 %s34, 2
      %s48 = sadd.s32 %s47, %s35
      %s49 = sld [smem:[#allocation5 + %s48]]
      %s50 = smul.u32 %s46, 2
      %s51 = sadd.s32 %s50, %s42
      %s52 = sld [smem:[#allocation5 + %s51]]
      %s53 = ssub.s32 %s49, %s52
      %p54 = scmp.eq.s32.totalorder %s53, 0
      %s56 = sadd.s32 %s55, 1
      %s57 = scalar_select %p54, %s55, %s56
      %p60 = pneg %p54
      %p61 = scmp.eq.s32.totalorder %s27, 3
      %p62 = por %p60, %p61
      %p63 = scmp.ne.s32.totalorder %s55, %s58
      %p64 = scmp.eq.s32.totalorder %s27, 0
      %p65 = por %p63, %p64
      %p66 = scmp.ne.s32.totalorder %s55, %s58
      %p67 = scmp.eq.s32.totalorder %s32, 3
      %p68 = por %p66, %p67
      %p69 = scmp.ne.s32.totalorder %s58, %s59
      %p70 = scmp.eq.s32.totalorder %s32, 0
      %p71 = por %p69, %p70
      %p72 = scmp.ne.s32.totalorder %s58, %s59
      %p73 = scmp.eq.s32.totalorder %s33, 3
      %p74 = por %p72, %p73
      %p76 = scmp.ne.s32.totalorder %s59, %s75
      %p77 = scmp.eq.s32.totalorder %s33, 0
      %p78 = por %p76, %p77
      %s79 = smul.u32 %s34, 2
      %s80 = sadd.s32 %s79, %s35
      %s81 = sld [smem:[#allocation5 + %s80]]
      %s82 = smul.u32 %s46, 2
      %s83 = sadd.s32 %s82, %s42
      %s84 = sld [smem:[#allocation5 + %s83]]
      %s85 = ssub.s32 %s81, %s84
      %p86 = scmp.eq.s32.totalorder %s85, 0
      %s88 = sadd.s32 %s87, 1
      %s89 = scalar_select %p86, %s87, %s88
      %p92 = pneg %p86
      %p93 = scmp.eq.s32.totalorder %s27, 3
      %p94 = por %p92, %p93
      %p95 = scmp.ne.s32.totalorder %s87, %s90
      %p96 = scmp.eq.s32.totalorder %s27, 0
      %p97 = por %p95, %p96
      %p98 = scmp.ne.s32.totalorder %s87, %s90
      %p99 = scmp.eq.s32.totalorder %s32, 3
      %p100 = por %p98, %p99
      %p101 = scmp.ne.s32.totalorder %s90, %s91
      %p102 = scmp.eq.s32.totalorder %s32, 0
      %p103 = por %p101, %p102
      %p104 = scmp.ne.s32.totalorder %s90, %s91
      %p105 = scmp.eq.s32.totalorder %s33, 3
      %p106 = por %p104, %p105
      %p108 = scmp.ne.s32.totalorder %s91, %s107
      %p109 = scmp.eq.s32.totalorder %s33, 0
      %p110 = por %p108, %p109
      %s111 = ssub.s32 %s34, %s46
      %p112 = scmp.eq.s32.totalorder %s111, 0
      %s114 = sadd.s32 %s113, 1
      %s115 = scalar_select %p112, %s113, %s114
      %p118 = pneg %p112
      %p119 = scmp.eq.s32.totalorder %s27, 3
      %p120 = por %p118, %p119
      %p121 = scmp.ne.s32.totalorder %s113, %s116
      %p122 = scmp.eq.s32.totalorder %s27, 0
      %p123 = por %p121, %p122
      %p124 = scmp.ne.s32.totalorder %s113, %s116
      %p125 = scmp.eq.s32.totalorder %s32, 3
      %p126 = por %p124, %p125
      %p127 = scmp.ne.s32.totalorder %s116, %s117
      %p128 = scmp.eq.s32.totalorder %s32, 0
      %p129 = por %p127, %p128
      %p130 = scmp.ne.s32.totalorder %s116, %s117
      %p131 = scmp.eq.s32.totalorder %s33, 3
      %p132 = por %p130, %p131
      %p134 = scmp.ne.s32.totalorder %s117, %s133
      %p135 = scmp.eq.s32.totalorder %s33, 0
      %p136 = por %p134, %p135
      %s137 = ssub.s32 %s34, %s46
      %p138 = scmp.eq.s32.totalorder %s137, 0
      %s140 = sadd.s32 %s139, 1
      %s141 = scalar_select %p138, %s139, %s140
      %p144 = pneg %p138
      %p145 = scmp.eq.s32.totalorder %s27, 3
      %p146 = por %p144, %p145
      %p147 = scmp.ne.s32.totalorder %s139, %s142
      %p148 = scmp.eq.s32.totalorder %s27, 0
      %p149 = por %p147, %p148
      %p150 = scmp.ne.s32.totalorder %s139, %s142
      %p151 = scmp.eq.s32.totalorder %s32, 3
      %p152 = por %p150, %p151
      %p153 = scmp.ne.s32.totalorder %s142, %s143
      %p154 = scmp.eq.s32.totalorder %s32, 0
      %p155 = por %p153, %p154
      %p156 = scmp.ne.s32.totalorder %s142, %s143
      %p157 = scmp.eq.s32.totalorder %s33, 3
      %p158 = por %p156, %p157
      %p160 = scmp.ne.s32.totalorder %s143, %s159
      %p161 = scmp.eq.s32.totalorder %s33, 0
      %p162 = por %p160, %p161
      %p163 = scmp.le.s32.totalorder 1, %s27
      %p164 = scmp.lt.s32.totalorder %s27, 5
      %p165 = pnand %p163, %p164
      %p166 = pneg %p165
      // Predicated region
      $region9: #{tpu_custom_call.1} parent=5 // pred_check
        _
      $region10: #{tpu_custom_call.1} parent=5 // pred_check_branch
        %168 = sbr.rel (%p165) target = $region12
      $region11: #{tpu_custom_call.1} parent=5 // pred_region
        %s169 = ssub.s32 %s27, 1
      $region12: #{tpu_custom_call.1} parent=5 // pred_fallthru
        _
      %p170 = scmp.lt.s32.totalorder %s27, 4
      // Predicated region
      $region13: #{tpu_custom_call.1} parent=5 // pred_check
        %p171 = pneg %p170
      $region14: #{tpu_custom_call.1} parent=5 // pred_check_branch
        %173 = sbr.rel (%p171) target = $region16
      $region15: #{tpu_custom_call.1} parent=5 // pred_region
        // Predicated region
        $region17: #{tpu_custom_call.1} parent=15 // pred_check
          %p174 = pneg %p65
        $region18: #{tpu_custom_call.1} parent=15 // pred_check_branch
          %176 = sbr.rel (%p174) target = $region20
        $region19: #{tpu_custom_call.1} parent=15 // pred_region
          %s177 = smul.u32 %s34, 2
          %s178 = sadd.s32 %s177, %s35
          %s179 = sld [smem:[#allocation5 + %s178]]
          %p180 = scmp.lt.s32.totalorder %s179, 1
          %s181 = scalar_select %p180, %s179, 1
          %s182 = scalar_lea.vmem %s2, %s181
          %s183 = smul.u32 %s34, 2
          %s184 = sadd.s32 %s183, %s35
          %s185 = sld [smem:[#allocation5 + %s184]]
        $region20: #{tpu_custom_call.1} parent=15 // pred_fallthru
          _
        // Predicated region
        $region21: #{tpu_custom_call.1} parent=15 // pred_check
          %p186 = pneg %p97
        $region22: #{tpu_custom_call.1} parent=15 // pred_check_branch
          %188 = sbr.rel (%p186) target = $region24
        $region23: #{tpu_custom_call.1} parent=15 // pred_region
          %s189 = smul.u32 %s34, 2
          %s190 = sadd.s32 %s189, %s35
          %s191 = sld [smem:[#allocation5 + %s190]]
          %p192 = scmp.lt.s32.totalorder %s191, 1
          %s193 = scalar_select %p192, %s191, 1
          %s194 = smul.addr %s193, 4
          %s195 = scalar_lea.vmem %s3, %s194
          %s196 = smul.u32 %s34, 2
          %s197 = sadd.s32 %s196, %s35
          %s198 = sld [smem:[#allocation5 + %s197]]
        $region24: #{tpu_custom_call.1} parent=15 // pred_fallthru
          _
        // Predicated region
        $region25: #{tpu_custom_call.1} parent=15 // pred_check
          %p199 = pneg %p123
        $region26: #{tpu_custom_call.1} parent=15 // pred_check_branch
          %201 = sbr.rel (%p199) target = $region28
        $region27: #{tpu_custom_call.1} parent=15 // pred_region
          %s202 = sand.u32 %s113, 1
          %s203 = scalar_lea.sflag [#allocation7], %s202
          %s204 = sand.u32 %s113, 1
          %s205 = smul.addr %s204, 32
          %s206 = scalar_lea.vmem [#allocation6], %s205
          %s207 = smul.u32 4, %s34
          %s209 = ssub.s32 512, 512
          %210 = vsyncadd %s203, %s209
          %s211 = smul.addr %s207, 128
          %s212 = scalar_lea.hbm %s4, %s211
          %s214 = sshll.u32 %s206, 4
          %s215 = int_to_ptr.vmem [resolvable:$true] %s214
          %217 = dma.hbm_to_vmem [thread:$0]  %s212, 512, %s215, %s203
        $region28: #{tpu_custom_call.1} parent=15 // pred_fallthru
          _
      $region16: #{tpu_custom_call.1} parent=5 // pred_fallthru
        _
      %p218 = scmp.le.s32.totalorder 1, %s27
      %p219 = scmp.lt.s32.totalorder %s27, 5
      %p220 = pnand %p218, %p219
      %p221 = pneg %p220
      // Predicated region
      $region29: #{tpu_custom_call.1} parent=5 // pred_check
        _
      $region30: #{tpu_custom_call.1} parent=5 // pred_check_branch
        %223 = sbr.rel (%p220) target = $region32
      $region31: #{tpu_custom_call.1} parent=5 // pred_region
        %s224 = ssub.s32 %s27, 1
        %s225 = sand.u32 %s116, 1
        %s226 = scalar_lea.sflag [#allocation7], %s225
        %s227 = sand.u32 %s116, 1
        %s228 = smul.addr %s227, 32
        %s229 = scalar_lea.vmem [#allocation6], %s228
        // Predicated region
        $region33: #{tpu_custom_call.1} parent=31 // pred_check
          %p230 = pneg %p129
        $region34: #{tpu_custom_call.1} parent=31 // pred_check_branch
          %232 = sbr.rel (%p230) target = $region36
        $region35: #{tpu_custom_call.1} parent=31 // pred_region
          %233 = dma.done %s226, 512
        $region36: #{tpu_custom_call.1} parent=31 // pred_fallthru
          _
        %s234 = smul.u32 %s36, 2
        %s235 = sadd.s32 %s234, %s37
        %s236 = sld [smem:[#allocation5 + %s235]]
        %p237 = scmp.lt.s32.totalorder %s236, 1
        %s238 = scalar_select %p237, %s236, 1
        %s239 = scalar_lea.vmem %s2, %s238
        %p240 = pneg %p71
        %p241 = pneg %p68
        %s242 = smul.u32 %s36, 2
        %s243 = sadd.s32 %s242, %s37
        %s244 = sld [smem:[#allocation5 + %s243]]
        %p245 = scmp.lt.s32.totalorder %s244, 1
        %s246 = scalar_select %p245, %s244, 1
        %s247 = smul.addr %s246, 4
        %s248 = scalar_lea.vmem %s3, %s247
        %p249 = pneg %p103
        %p250 = pneg %p100
        %s251 = sand.u32 %s116, 1
        %s252 = scalar_lea.sflag [#allocation7], %s251
        %s253 = sand.u32 %s116, 1
        %s254 = smul.addr %s253, 32
        %s255 = scalar_lea.vmem [#allocation6], %s254
        %p256 = pneg %p129
        %p257 = pneg %p126
        %p258 = pneg %p155
        %p259 = pneg %p152
        %s260 = sand.u32 %s142, 1
        %s261 = scalar_lea.sflag [#allocation8], %s260
        %s262 = sand.u32 %s142, 1
        %s263 = smul.addr %s262, 32
        %s264 = scalar_lea.vmem [#allocation9], %s263
        %s265 = smul.u32 %s36, 2
        %s266 = sadd.s32 %s265, %s37
        %s267 = sld [smem:[#allocation5 + %s266]]
        %p268 = scmp.lt.s32.totalorder %s267, 1
        %s269 = scalar_select %p268, %s267, 1
        %s270 = scalar_lea.vmem %s2, %s269
        %s271 = smul.u32 %s36, 2
        %s272 = sadd.s32 %s271, %s37
        %s273 = sld [smem:[#allocation5 + %s272]]
        %s274 = smul.u32 %s36, 2
        %s275 = sadd.s32 %s274, %s37
        %s276 = sld [smem:[#allocation5 + %s275]]
        %p277 = scmp.lt.s32.totalorder %s276, 1
        %s278 = scalar_select %p277, %s276, 1
        %s279 = smul.addr %s278, 4
        %s280 = scalar_lea.vmem %s3, %s279
        %s281 = smul.u32 %s36, 2
        %s282 = sadd.s32 %s281, %s37
        %s283 = sld [smem:[#allocation5 + %s282]]
        %s284 = smul.u32 4, %s36
        %s285 = smul.u32 4, %s36
        %p287 = scmp.eq.s32.totalorder %s37, 0
        // Predicated region
        $region37: #{tpu_custom_call.1} parent=31 // pred_check
          %p288 = pneg %p287
        $region38: #{tpu_custom_call.1} parent=31 // pred_check_branch
          %290 = sbr.rel (%p288) target = $region40
        $region39: #{tpu_custom_call.1} parent=31 // pred_region
          %v291 = vld [vmem:[%s229] sm:$0xff]
          %v292 = vld [vmem:[%s229 + $0x8] sm:$0xff]
          %v293 = vld [vmem:[%s229 + $0x10] sm:$0xff]
          %v294 = vld [vmem:[%s229 + $0x18] sm:$0xff]
          %295 = vst [vmem:[#allocation2] sm:$0xff] %v291
          %296 = vst [vmem:[#allocation2 + $0x8] sm:$0xff] %v292
          %297 = vst [vmem:[#allocation2 + $0x10] sm:$0xff] %v293
          %298 = vst [vmem:[#allocation2 + $0x18] sm:$0xff] %v294
        $region40: #{tpu_custom_call.1} parent=31 // pred_fallthru
          _
        %s299 = sld [smem:[#allocation4 + %s36]]
        %p300 = scmp.lt.s32.totalorder %s37, %s299
        // Predicated region
        $region41: #{tpu_custom_call.1} parent=31 // pred_check
          %p301 = pneg %p300
        $region42: #{tpu_custom_call.1} parent=31 // pred_check_branch
          %303 = sbr.rel (%p301) target = $region44
        $region43: #{tpu_custom_call.1} parent=31 // pred_region
          %s304 = smul.u32 %s36, 512
          %v305 = vlaneseq
          %v306 = vshrl.u32 %v305, 7
          %v307 = vadd.s32 %v306, 8
          %v308 = vadd.s32 %v306, 16
          %v309 = vadd.s32 %v306, 24
          %v310 = vadd.s32 %v306, 32
          %v311 = vadd.s32 %v306, 40
          %v312 = vadd.s32 %v306, 48
          %v313 = vadd.s32 %v306, 56
          %v314 = vadd.s32 %v306, 64
          %v315 = vadd.s32 %v306, 72
          %v316 = vadd.s32 %v306, 80
          %v317 = vadd.s32 %v306, 88
          %v318 = vadd.s32 %v306, 96
          %v319 = vadd.s32 %v306, 104
          %v320 = vadd.s32 %v306, 112
          %v321 = vadd.s32 %v306, 120
          %v322 = vadd.s32 %v306, 128
          %v323 = vadd.s32 %v306, 136
          %v324 = vadd.s32 %v306, 144
          %v325 = vadd.s32 %v306, 152
          %v326 = vadd.s32 %v306, 160
          %v327 = vadd.s32 %v306, 168
          %v328 = vadd.s32 %v306, 176
          %v329 = vadd.s32 %v306, 184
          %v330 = vadd.s32 %v306, 192
          %v331 = vadd.s32 %v306, 200
          %v332 = vadd.s32 %v306, 208
          %v333 = vadd.s32 %v306, 216
          %v334 = vadd.s32 %v306, 224
          %v335 = vadd.s32 %v306, 232
          %v336 = vadd.s32 %v306, 240
          %v337 = vadd.s32 %v306, 248
          %v338 = vadd.s32 %v306, 256
          %v339 = vadd.s32 %v306, 264
          %v340 = vadd.s32 %v306, 272
          %v341 = vadd.s32 %v306, 280
          %v342 = vadd.s32 %v306, 288
          %v343 = vadd.s32 %v306, 296
          %v344 = vadd.s32 %v306, 304
          %v345 = vadd.s32 %v306, 312
          %v346 = vadd.s32 %v306, 320
          %v347 = vadd.s32 %v306, 328
          %v348 = vadd.s32 %v306, 336
          %v349 = vadd.s32 %v306, 344
          %v350 = vadd.s32 %v306, 352
          %v351 = vadd.s32 %v306, 360
          %v352 = vadd.s32 %v306, 368
          %v353 = vadd.s32 %v306, 376
          %v354 = vadd.s32 %v306, 384
          %v355 = vadd.s32 %v306, 392
          %v356 = vadd.s32 %v306, 400
          %v357 = vadd.s32 %v306, 408
          %v358 = vadd.s32 %v306, 416
          %v359 = vadd.s32 %v306, 424
          %v360 = vadd.s32 %v306, 432
          %v361 = vadd.s32 %v306, 440
          %v362 = vadd.s32 %v306, 448
          %v363 = vadd.s32 %v306, 456
          %v364 = vadd.s32 %v306, 464
          %v365 = vadd.s32 %v306, 472
          %v366 = vadd.s32 %v306, 480
          %v367 = vadd.s32 %v306, 488
          %v368 = vadd.s32 %v306, 496
          %v369 = vadd.s32 %v306, 504
          %v370 = vstv %s304
          %v371 = vadd.s32 %v370, %v306
          %v372 = vadd.s32 %v370, %v307
          %v373 = vadd.s32 %v370, %v308
          %v374 = vadd.s32 %v370, %v309
          %v375 = vadd.s32 %v370, %v310
          %v376 = vadd.s32 %v370, %v311
          %v377 = vadd.s32 %v370, %v312
          %v378 = vadd.s32 %v370, %v313
          %v379 = vadd.s32 %v370, %v314
          %v380 = vadd.s32 %v370, %v315
          %v381 = vadd.s32 %v370, %v316
          %v382 = vadd.s32 %v370, %v317
          %v383 = vadd.s32 %v370, %v318
          %v384 = vadd.s32 %v370, %v319
          %v385 = vadd.s32 %v370, %v320
          %v386 = vadd.s32 %v370, %v321
          %v387 = vadd.s32 %v370, %v322
          %v388 = vadd.s32 %v370, %v323
          %v389 = vadd.s32 %v370, %v324
          %v390 = vadd.s32 %v370, %v325
          %v391 = vadd.s32 %v370, %v326
          %v392 = vadd.s32 %v370, %v327
          %v393 = vadd.s32 %v370, %v328
          %v394 = vadd.s32 %v370, %v329
          %v395 = vadd.s32 %v370, %v330
          %v396 = vadd.s32 %v370, %v331
          %v397 = vadd.s32 %v370, %v332
          %v398 = vadd.s32 %v370, %v333
          %v399 = vadd.s32 %v370, %v334
          %v400 = vadd.s32 %v370, %v335
          %v401 = vadd.s32 %v370, %v336
          %v402 = vadd.s32 %v370, %v337
          %v403 = vadd.s32 %v370, %v338
          %v404 = vadd.s32 %v370, %v339
          %v405 = vadd.s32 %v370, %v340
          %v406 = vadd.s32 %v370, %v341
          %v407 = vadd.s32 %v370, %v342
          %v408 = vadd.s32 %v370, %v343
          %v409 = vadd.s32 %v370, %v344
          %v410 = vadd.s32 %v370, %v345
          %v411 = vadd.s32 %v370, %v346
          %v412 = vadd.s32 %v370, %v347
          %v413 = vadd.s32 %v370, %v348
          %v414 = vadd.s32 %v370, %v349
          %v415 = vadd.s32 %v370, %v350
          %v416 = vadd.s32 %v370, %v351
          %v417 = vadd.s32 %v370, %v352
          %v418 = vadd.s32 %v370, %v353
          %v419 = vadd.s32 %v370, %v354
          %v420 = vadd.s32 %v370, %v355
          %v421 = vadd.s32 %v370, %v356
          %v422 = vadd.s32 %v370, %v357
          %v423 = vadd.s32 %v370, %v358
          %v424 = vadd.s32 %v370, %v359
          %v425 = vadd.s32 %v370, %v360
          %v426 = vadd.s32 %v370, %v361
          %v427 = vadd.s32 %v370, %v362
          %v428 = vadd.s32 %v370, %v363
          %v429 = vadd.s32 %v370, %v364
          %v430 = vadd.s32 %v370, %v365
          %v431 = vadd.s32 %v370, %v366
          %v432 = vadd.s32 %v370, %v367
          %v433 = vadd.s32 %v370, %v368
          %v434 = vadd.s32 %v370, %v369
          %v435 = vld [vmem:[%s270] sm:$0x1]
          %v436 = vlaneseq
          %v437 = vshrl.u32 %v436, 7
          %v438 = vsub.s32 0, %v437
          %v439 = vrot.slane %v435, %v438
          %vm440 = vcmp.eq.s32.totalorder %v439, %v371
          %vm441 = vcmp.eq.s32.totalorder %v439, %v372
          %vm442 = vcmp.eq.s32.totalorder %v439, %v373
          %vm443 = vcmp.eq.s32.totalorder %v439, %v374
          %vm444 = vcmp.eq.s32.totalorder %v439, %v375
          %vm445 = vcmp.eq.s32.totalorder %v439, %v376
          %vm446 = vcmp.eq.s32.totalorder %v439, %v377
          %vm447 = vcmp.eq.s32.totalorder %v439, %v378
          %vm448 = vcmp.eq.s32.totalorder %v439, %v379
          %vm449 = vcmp.eq.s32.totalorder %v439, %v380
          %vm450 = vcmp.eq.s32.totalorder %v439, %v381
          %vm451 = vcmp.eq.s32.totalorder %v439, %v382
          %vm452 = vcmp.eq.s32.totalorder %v439, %v383
          %vm453 = vcmp.eq.s32.totalorder %v439, %v384
          %vm454 = vcmp.eq.s32.totalorder %v439, %v385
          %vm455 = vcmp.eq.s32.totalorder %v439, %v386
          %vm456 = vcmp.eq.s32.totalorder %v439, %v387
          %vm457 = vcmp.eq.s32.totalorder %v439, %v388
          %vm458 = vcmp.eq.s32.totalorder %v439, %v389
          %vm459 = vcmp.eq.s32.totalorder %v439, %v390
          %vm460 = vcmp.eq.s32.totalorder %v439, %v391
          %vm461 = vcmp.eq.s32.totalorder %v439, %v392
          %vm462 = vcmp.eq.s32.totalorder %v439, %v393
          %vm463 = vcmp.eq.s32.totalorder %v439, %v394
          %vm464 = vcmp.eq.s32.totalorder %v439, %v395
          %vm465 = vcmp.eq.s32.totalorder %v439, %v396
          %vm466 = vcmp.eq.s32.totalorder %v439, %v397
          %vm467 = vcmp.eq.s32.totalorder %v439, %v398
          %vm468 = vcmp.eq.s32.totalorder %v439, %v399
          %vm469 = vcmp.eq.s32.totalorder %v439, %v400
          %vm470 = vcmp.eq.s32.totalorder %v439, %v401
          %vm471 = vcmp.eq.s32.totalorder %v439, %v402
          %vm472 = vcmp.eq.s32.totalorder %v439, %v403
          %vm473 = vcmp.eq.s32.totalorder %v439, %v404
          %vm474 = vcmp.eq.s32.totalorder %v439, %v405
          %vm475 = vcmp.eq.s32.totalorder %v439, %v406
          %vm476 = vcmp.eq.s32.totalorder %v439, %v407
          %vm477 = vcmp.eq.s32.totalorder %v439, %v408
          %vm478 = vcmp.eq.s32.totalorder %v439, %v409
          %vm479 = vcmp.eq.s32.totalorder %v439, %v410
          %vm480 = vcmp.eq.s32.totalorder %v439, %v411
          %vm481 = vcmp.eq.s32.totalorder %v439, %v412
          %vm482 = vcmp.eq.s32.totalorder %v439, %v413
          %vm483 = vcmp.eq.s32.totalorder %v439, %v414
          %vm484 = vcmp.eq.s32.totalorder %v439, %v415
          %vm485 = vcmp.eq.s32.totalorder %v439, %v416
          %vm486 = vcmp.eq.s32.totalorder %v439, %v417
          %vm487 = vcmp.eq.s32.totalorder %v439, %v418
          %vm488 = vcmp.eq.s32.totalorder %v439, %v419
          %vm489 = vcmp.eq.s32.totalorder %v439, %v420
          %vm490 = vcmp.eq.s32.totalorder %v439, %v421
          %vm491 = vcmp.eq.s32.totalorder %v439, %v422
          %vm492 = vcmp.eq.s32.totalorder %v439, %v423
          %vm493 = vcmp.eq.s32.totalorder %v439, %v424
          %vm494 = vcmp.eq.s32.totalorder %v439, %v425
          %vm495 = vcmp.eq.s32.totalorder %v439, %v426
          %vm496 = vcmp.eq.s32.totalorder %v439, %v427
          %vm497 = vcmp.eq.s32.totalorder %v439, %v428
          %vm498 = vcmp.eq.s32.totalorder %v439, %v429
          %vm499 = vcmp.eq.s32.totalorder %v439, %v430
          %vm500 = vcmp.eq.s32.totalorder %v439, %v431
          %vm501 = vcmp.eq.s32.totalorder %v439, %v432
          %vm502 = vcmp.eq.s32.totalorder %v439, %v433
          %vm503 = vcmp.eq.s32.totalorder %v439, %v434
          %v504 = vsel %vm440, 1, 0
          %v505 = vsel %vm441, 1, 0
          %v506 = vsel %vm442, 1, 0
          %v507 = vsel %vm443, 1, 0
          %v508 = vsel %vm444, 1, 0
          %v509 = vsel %vm445, 1, 0
          %v510 = vsel %vm446, 1, 0
          %v511 = vsel %vm447, 1, 0
          %v512 = vsel %vm448, 1, 0
          %v513 = vsel %vm449, 1, 0
          %v514 = vsel %vm450, 1, 0
          %v515 = vsel %vm451, 1, 0
          %v516 = vsel %vm452, 1, 0
          %v517 = vsel %vm453, 1, 0
          %v518 = vsel %vm454, 1, 0
          %v519 = vsel %vm455, 1, 0
          %v520 = vsel %vm456, 1, 0
          %v521 = vsel %vm457, 1, 0
          %v522 = vsel %vm458, 1, 0
          %v523 = vsel %vm459, 1, 0
          %v524 = vsel %vm460, 1, 0
          %v525 = vsel %vm461, 1, 0
          %v526 = vsel %vm462, 1, 0
          %v527 = vsel %vm463, 1, 0
          %v528 = vsel %vm464, 1, 0
          %v529 = vsel %vm465, 1, 0
          %v530 = vsel %vm466, 1, 0
          %v531 = vsel %vm467, 1, 0
          %v532 = vsel %vm468, 1, 0
          %v533 = vsel %vm469, 1, 0
          %v534 = vsel %vm470, 1, 0
          %v535 = vsel %vm471, 1, 0
          %v536 = vsel %vm472, 1, 0
          %v537 = vsel %vm473, 1, 0
          %v538 = vsel %vm474, 1, 0
          %v539 = vsel %vm475, 1, 0
          %v540 = vsel %vm476, 1, 0
          %v541 = vsel %vm477, 1, 0
          %v542 = vsel %vm478, 1, 0
          %v543 = vsel %vm479, 1, 0
          %v544 = vsel %vm480, 1, 0
          %v545 = vsel %vm481, 1, 0
          %v546 = vsel %vm482, 1, 0
          %v547 = vsel %vm483, 1, 0
          %v548 = vsel %vm484, 1, 0
          %v549 = vsel %vm485, 1, 0
          %v550 = vsel %vm486, 1, 0
          %v551 = vsel %vm487, 1, 0
          %v552 = vsel %vm488, 1, 0
          %v553 = vsel %vm489, 1, 0
          %v554 = vsel %vm490, 1, 0
          %v555 = vsel %vm491, 1, 0
          %v556 = vsel %vm492, 1, 0
          %v557 = vsel %vm493, 1, 0
          %v558 = vsel %vm494, 1, 0
          %v559 = vsel %vm495, 1, 0
          %v560 = vsel %vm496, 1, 0
          %v561 = vsel %vm497, 1, 0
          %v562 = vsel %vm498, 1, 0
          %v563 = vsel %vm499, 1, 0
          %v564 = vsel %vm500, 1, 0
          %v565 = vsel %vm501, 1, 0
          %v566 = vsel %vm502, 1, 0
          %v567 = vsel %vm503, 1, 0
          %v568 = vcvt.s32.f32 %v504
          %v569 = vcvt.s32.f32 %v505
          %v570 = vcvt.s32.f32 %v506
          %v571 = vcvt.s32.f32 %v507
          %v572 = vcvt.s32.f32 %v508
          %v573 = vcvt.s32.f32 %v509
          %v574 = vcvt.s32.f32 %v510
          %v575 = vcvt.s32.f32 %v511
          %v576 = vcvt.s32.f32 %v512
          %v577 = vcvt.s32.f32 %v513
          %v578 = vcvt.s32.f32 %v514
          %v579 = vcvt.s32.f32 %v515
          %v580 = vcvt.s32.f32 %v516
          %v581 = vcvt.s32.f32 %v517
          %v582 = vcvt.s32.f32 %v518
          %v583 = vcvt.s32.f32 %v519
          %v584 = vcvt.s32.f32 %v520
          %v585 = vcvt.s32.f32 %v521
          %v586 = vcvt.s32.f32 %v522
          %v587 = vcvt.s32.f32 %v523
          %v588 = vcvt.s32.f32 %v524
          %v589 = vcvt.s32.f32 %v525
          %v590 = vcvt.s32.f32 %v526
          %v591 = vcvt.s32.f32 %v527
          %v592 = vcvt.s32.f32 %v528
          %v593 = vcvt.s32.f32 %v529
          %v594 = vcvt.s32.f32 %v530
          %v595 = vcvt.s32.f32 %v531
          %v596 = vcvt.s32.f32 %v532
          %v597 = vcvt.s32.f32 %v533
          %v598 = vcvt.s32.f32 %v534
          %v599 = vcvt.s32.f32 %v535
          %v600 = vcvt.s32.f32 %v536
          %v601 = vcvt.s32.f32 %v537
          %v602 = vcvt.s32.f32 %v538
          %v603 = vcvt.s32.f32 %v539
          %v604 = vcvt.s32.f32 %v540
          %v605 = vcvt.s32.f32 %v541
          %v606 = vcvt.s32.f32 %v542
          %v607 = vcvt.s32.f32 %v543
          %v608 = vcvt.s32.f32 %v544
          %v609 = vcvt.s32.f32 %v545
          %v610 = vcvt.s32.f32 %v546
          %v611 = vcvt.s32.f32 %v547
          %v612 = vcvt.s32.f32 %v548
          %v613 = vcvt.s32.f32 %v549
          %v614 = vcvt.s32.f32 %v550
          %v615 = vcvt.s32.f32 %v551
          %v616 = vcvt.s32.f32 %v552
          %v617 = vcvt.s32.f32 %v553
          %v618 = vcvt.s32.f32 %v554
          %v619 = vcvt.s32.f32 %v555
          %v620 = vcvt.s32.f32 %v556
          %v621 = vcvt.s32.f32 %v557
          %v622 = vcvt.s32.f32 %v558
          %v623 = vcvt.s32.f32 %v559
          %v624 = vcvt.s32.f32 %v560
          %v625 = vcvt.s32.f32 %v561
          %v626 = vcvt.s32.f32 %v562
          %v627 = vcvt.s32.f32 %v563
          %v628 = vcvt.s32.f32 %v564
          %v629 = vcvt.s32.f32 %v565
          %v630 = vcvt.s32.f32 %v566
          %v631 = vcvt.s32.f32 %v567
          %v632 = vpack.c.bf16 %v569, %v568
          %v633 = vpack.c.bf16 %v571, %v570
          %v634 = vpack.c.bf16 %v573, %v572
          %v635 = vpack.c.bf16 %v575, %v574
          %v636 = vpack.c.bf16 %v577, %v576
          %v637 = vpack.c.bf16 %v579, %v578
          %v638 = vpack.c.bf16 %v581, %v580
          %v639 = vpack.c.bf16 %v583, %v582
          %v640 = vpack.c.bf16 %v585, %v584
          %v641 = vpack.c.bf16 %v587, %v586
          %v642 = vpack.c.bf16 %v589, %v588
          %v643 = vpack.c.bf16 %v591, %v590
          %v644 = vpack.c.bf16 %v593, %v592
          %v645 = vpack.c.bf16 %v595, %v594
          %v646 = vpack.c.bf16 %v597, %v596
          %v647 = vpack.c.bf16 %v599, %v598
          %v648 = vpack.c.bf16 %v601, %v600
          %v649 = vpack.c.bf16 %v603, %v602
          %v650 = vpack.c.bf16 %v605, %v604
          %v651 = vpack.c.bf16 %v607, %v606
          %v652 = vpack.c.bf16 %v609, %v608
          %v653 = vpack.c.bf16 %v611, %v610
          %v654 = vpack.c.bf16 %v613, %v612
          %v655 = vpack.c.bf16 %v615, %v614
          %v656 = vpack.c.bf16 %v617, %v616
          %v657 = vpack.c.bf16 %v619, %v618
          %v658 = vpack.c.bf16 %v621, %v620
          %v659 = vpack.c.bf16 %v623, %v622
          %v660 = vpack.c.bf16 %v625, %v624
          %v661 = vpack.c.bf16 %v627, %v626
          %v662 = vpack.c.bf16 %v629, %v628
          %v663 = vpack.c.bf16 %v631, %v630
          %v664 = vld [vmem:[#allocation2] sm:$0xff]
          %v665 = vld [vmem:[#allocation2 + $0x8] sm:$0xff]
          %v666 = vld [vmem:[#allocation2 + $0x10] sm:$0xff]
          %v667 = vld [vmem:[#allocation2 + $0x18] sm:$0xff]
          %v668 = vld [vmem:[%s280] sm:$0xf]
          %669 = vmatprep.subr.bf16.mxu0 0
          %670 = vmatpush1.bf16.xpose.msra.mxu0 %v632
          %671 = vmatprep.subr.bf16.mxu0 0
          %672 = vmatpush1.bf16.xpose.msra.mxu0 %v633
          %673 = vmatprep.subr.bf16.mxu0 0
          %674 = vmatpush1.bf16.xpose.msra.mxu0 %v634
          %675 = vmatprep.subr.bf16.mxu0 0
          %676 = vmatpush1.bf16.xpose.msra.mxu0 %v635
          %677 = vmatprep.subr.bf16.mxu0 0
          %678 = vmatpush1.bf16.xpose.msra.mxu0 %v636
          %679 = vmatprep.subr.bf16.mxu0 0
          %680 = vmatpush1.bf16.xpose.msra.mxu0 %v637
          %681 = vmatprep.subr.bf16.mxu0 0
          %682 = vmatpush1.bf16.xpose.msra.mxu0 %v638
          %683 = vmatprep.subr.bf16.mxu0 0
          %684 = vmatpush1.bf16.xpose.msra.mxu0 %v639
          %685 = vmatprep.subr.bf16.mxu0 0
          %686 = vmatpush1.bf16.xpose.msra.mxu0 %v640
          %687 = vmatprep.subr.bf16.mxu0 0
          %688 = vmatpush1.bf16.xpose.msra.mxu0 %v641
          %689 = vmatprep.subr.bf16.mxu0 0
          %690 = vmatpush1.bf16.xpose.msra.mxu0 %v642
          %691 = vmatprep.subr.bf16.mxu0 0
          %692 = vmatpush1.bf16.xpose.msra.mxu0 %v643
          %693 = vmatprep.subr.bf16.mxu0 0
          %694 = vmatpush1.bf16.xpose.msra.mxu0 %v644
          %695 = vmatprep.subr.bf16.mxu0 0
          %696 = vmatpush1.bf16.xpose.msra.mxu0 %v645
          %697 = vmatprep.subr.bf16.mxu0 0
          %698 = vmatpush1.bf16.xpose.msra.mxu0 %v646
          %699 = vmatprep.subr.bf16.mxu0 0
          %700 = vmatpush1.bf16.xpose.msra.mxu0 %v647
          %701 = vmatprep.mubr.bf16.mxu0 0
          %702 = vmatmul.mubr.bf16.gmra.mrb[0].mxu0 %v668
          %v703 = vpop.f32.mrb[0].mxu0
          %v704 = vadd.f32 0.0, %v703
          %v705 = vpop.f32.mrb[0].mxu0
          %v706 = vadd.f32 0.0, %v705
          %v707 = vpop.f32.mrb[0].mxu0
          %v708 = vpop.f32.mrb[0].mxu0
          %709 = vdwg.mxu0
          %710 = vmatprep.subr.bf16.mxu0 0
          %711 = vmatpush1.bf16.xpose.msra.mxu0 %v648
          %712 = vmatprep.subr.bf16.mxu0 0
          %713 = vmatpush1.bf16.xpose.msra.mxu0 %v649
          %714 = vmatprep.subr.bf16.mxu0 0
          %715 = vmatpush1.bf16.xpose.msra.mxu0 %v650
          %716 = vmatprep.subr.bf16.mxu0 0
          %717 = vmatpush1.bf16.xpose.msra.mxu0 %v651
          %718 = vmatprep.subr.bf16.mxu0 0
          %719 = vmatpush1.bf16.xpose.msra.mxu0 %v652
          %720 = vmatprep.subr.bf16.mxu0 0
          %721 = vmatpush1.bf16.xpose.msra.mxu0 %v653
          %722 = vmatprep.subr.bf16.mxu0 0
          %723 = vmatpush1.bf16.xpose.msra.mxu0 %v654
          %724 = vmatprep.subr.bf16.mxu0 0
          %725 = vmatpush1.bf16.xpose.msra.mxu0 %v655
          %726 = vmatprep.subr.bf16.mxu0 0
          %727 = vmatpush1.bf16.xpose.msra.mxu0 %v656
          %728 = vmatprep.subr.bf16.mxu0 0
          %729 = vmatpush1.bf16.xpose.msra.mxu0 %v657
          %730 = vmatprep.subr.bf16.mxu0 0
          %731 = vmatpush1.bf16.xpose.msra.mxu0 %v658
          %732 = vmatprep.subr.bf16.mxu0 0
          %733 = vmatpush1.bf16.xpose.msra.mxu0 %v659
          %734 = vmatprep.subr.bf16.mxu0 0
          %735 = vmatpush1.bf16.xpose.msra.mxu0 %v660
          %736 = vmatprep.subr.bf16.mxu0 0
          %737 = vmatpush1.bf16.xpose.msra.mxu0 %v661
          %738 = vmatprep.subr.bf16.mxu0 0
          %739 = vmatpush1.bf16.xpose.msra.mxu0 %v662
          %740 = vmatprep.subr.bf16.mxu0 0
          %741 = vmatpush1.bf16.xpose.msra.mxu0 %v663
          %742 = vmatprep.mubr.bf16.mxu0 0
          %743 = vmatmul.mubr.bf16.gmra.mrb[0].mxu0 %v668
          %v744 = vpop.f32.mrb[0].mxu0
          %v745 = vadd.f32 0.0, %v744
          %v746 = vpop.f32.mrb[0].mxu0
          %v747 = vadd.f32 0.0, %v746
          %v748 = vpop.f32.mrb[0].mxu0
          %v749 = vpop.f32.mrb[0].mxu0
          %750 = vdwg.mxu0
          %v751 = vadd.f32 %v664, %v704
          %v752 = vadd.f32 %v665, %v706
          %v753 = vadd.f32 %v666, %v745
          %v754 = vadd.f32 %v667, %v747
          %755 = vst [vmem:[#allocation2] sm:$0xff] %v751
          %756 = vst [vmem:[#allocation2 + $0x8] sm:$0xff] %v752
          %757 = vst [vmem:[#allocation2 + $0x10] sm:$0xff] %v753
          %758 = vst [vmem:[#allocation2 + $0x18] sm:$0xff] %v754
        $region44: #{tpu_custom_call.1} parent=31 // pred_fallthru
          _
        %p759 = scmp.eq.s32.totalorder %s37, 1
        // Predicated region
        $region45: #{tpu_custom_call.1} parent=31 // pred_check
          %p760 = pneg %p759
        $region46: #{tpu_custom_call.1} parent=31 // pred_check_branch
          %762 = sbr.rel (%p760) target = $region48
        $region47: #{tpu_custom_call.1} parent=31 // pred_region
          %v763 = vld [vmem:[#allocation2] sm:$0xff]
          %v764 = vld [vmem:[#allocation2 + $0x8] sm:$0xff]
          %v765 = vld [vmem:[#allocation2 + $0x10] sm:$0xff]
          %v766 = vld [vmem:[#allocation2 + $0x18] sm:$0xff]
          %767 = vst [vmem:[%s264] sm:$0xff] %v763
          %768 = vst [vmem:[%s264 + $0x8] sm:$0xff] %v764
          %769 = vst [vmem:[%s264 + $0x10] sm:$0xff] %v765
          %770 = vst [vmem:[%s264 + $0x18] sm:$0xff] %v766
        $region48: #{tpu_custom_call.1} parent=31 // pred_fallthru
          _
        %s771 = sand.u32 %s142, 1
        %s772 = scalar_lea.sflag [#allocation8], %s771
        %s773 = sand.u32 %s142, 1
        %s774 = smul.addr %s773, 32
        %s775 = scalar_lea.vmem [#allocation9], %s774
        // Predicated region
        $region49: #{tpu_custom_call.1} parent=31 // pred_check
          %p776 = pneg %p152
        $region50: #{tpu_custom_call.1} parent=31 // pred_check_branch
          %778 = sbr.rel (%p776) target = $region52
        $region51: #{tpu_custom_call.1} parent=31 // pred_region
          %s779 = smul.u32 4, %s36
          %s781 = ssub.s32 512, 512
          %782 = vsyncadd %s772, %s781
          %s783 = smul.addr %s779, 128
          %s784 = scalar_lea.hbm %s5, %s783
          %s786 = sshll.u32 %s775, 4
          %s787 = int_to_ptr.vmem [resolvable:$true] %s786
          %789 = dma.vmem_to_hbm [thread:$0]  %s787, 512, %s784, %s772
        $region52: #{tpu_custom_call.1} parent=31 // pred_fallthru
          _
      $region32: #{tpu_custom_call.1} parent=5 // pred_fallthru
        _
      %p790 = scmp.le.s32.totalorder 2, %s27
      // Predicated region
      $region53: #{tpu_custom_call.1} parent=5 // pred_check
        %p791 = pneg %p790
      $region54: #{tpu_custom_call.1} parent=5 // pred_check_branch
        %793 = sbr.rel (%p791) target = $region56
      $region55: #{tpu_custom_call.1} parent=5 // pred_region
        %s794 = ssub.s32 %s27, 2
        // Predicated region
        $region57: #{tpu_custom_call.1} parent=55 // pred_check
          %p795 = pneg %p158
        $region58: #{tpu_custom_call.1} parent=55 // pred_check_branch
          %797 = sbr.rel (%p795) target = $region60
        $region59: #{tpu_custom_call.1} parent=55 // pred_region
          %s798 = sand.u32 %s143, 1
          %s799 = scalar_lea.sflag [#allocation8], %s798
          %s800 = sand.u32 %s143, 1
          %s801 = smul.addr %s800, 32
          %s802 = scalar_lea.vmem [#allocation9], %s801
          %803 = dma.done %s799, 512
        $region60: #{tpu_custom_call.1} parent=55 // pred_fallthru
          _
      $region56: #{tpu_custom_call.1} parent=5 // pred_fallthru
        _
    $region6: #{tpu_custom_call.1} parent=1 // loop_footer
      %s31 = sadd.s32 1, %s27
    $region7: #{tpu_custom_call.1} parent=1 // loop_footer_branch
      %26 = sbr.rel target = $region3
    $region8: #{tpu_custom_call.1} parent=1 // loop_exit
      _
    %804 = vsyncpa [#allocation7], 1
    %s805 = scalar_lea.sflag [#allocation7], 1
    %806 = vsyncpa %s805, 1
    %807 = vsyncpa [#allocation8], 1
    %s808 = scalar_lea.sflag [#allocation8], 1
    %809 = vsyncpa %s808, 1

</llo_original>
